<compile_context>
chip_gen: v6e
topology: v6e:2x2x1
jax: 0.10.0
libtpu: 0.0.40
codegen_flags: <defaults>
</compile_context>

<pallas_src>
import functools

import jax
import jax.numpy as jnp
import numpy as np
from jax.experimental import pallas as pl
from jax.experimental.pallas import tpu as pltpu

_LANE = 128


def _cdiv(a, b):
    return -(-a // b)


def _round_up(a, b):
    return _cdiv(a, b) * b


def _vmem_capacity_bytes():
    try:
        return int(pltpu.get_tpu_info().vmem_capacity_bytes)
    except Exception:
        return 64 * 1024 * 1024  # conservative fallback (v7x-sized)


def _moments_kernel(x_ref, y_ref, sx_ref, sy_ref, sxx_ref, syy_ref, sxy_ref, *,
                    tiles_per_split, n_tiles, tn, n_true, mask_tail, has_phantom):
    """Accumulate per-row raw moments of one (TB, TN) tile into (1, TB, 1) outputs."""
    s = pl.program_id(0)            # N-range split (parallel; megacore on v7x)
    k = pl.program_id(2)            # N tile within the split (reduction axis)
    tile = s * tiles_per_split + k

    @pl.when(k == 0)
    def _init():
        sx_ref[...] = jnp.zeros_like(sx_ref)
        sy_ref[...] = jnp.zeros_like(sy_ref)
        sxx_ref[...] = jnp.zeros_like(sxx_ref)
        syy_ref[...] = jnp.zeros_like(syy_ref)
        sxy_ref[...] = jnp.zeros_like(sxy_ref)

    def _accumulate():
        x = x_ref[...].astype(jnp.float32)
        y = y_ref[...].astype(jnp.float32)
        if mask_tail:
            # Ragged last N tile: OOB lanes hold unspecified data -> mask BEFORE any
            # product/sum.  Statically compiled out when N % TN == 0.
            col = tile * tn + jax.lax.broadcasted_iota(jnp.int32, x.shape, 1)
            valid = col < n_true
            x = jnp.where(valid, x, 0.0)
            y = jnp.where(valid, y, 0.0)
        sx_ref[...] += jnp.sum(x, axis=1, keepdims=True)[None]
        sy_ref[...] += jnp.sum(y, axis=1, keepdims=True)[None]
        sxx_ref[...] += jnp.sum(x * x, axis=1, keepdims=True)[None]
        syy_ref[...] += jnp.sum(y * y, axis=1, keepdims=True)[None]
        sxy_ref[...] += jnp.sum(x * y, axis=1, keepdims=True)[None]

    if has_phantom:
        # The last split may cover one duplicate (clamped) tile; skip its contribution.
        pl.when(tile < n_tiles)(_accumulate)
    else:
        _accumulate()


@functools.partial(jax.jit, static_argnames=("tn_cap_override",))
def cc_loss(x, y, tn_cap_override=None):
    """x, y: (B, ...) arrays (any float dtype). Returns scalar f32 = mean batch CCC."""
    assert x.shape == y.shape
    B = x.shape[0]
    N = int(np.prod(x.shape[1:]))

    # Metadata-only reshapes; no padded HBM copies anywhere.
    x2 = x.reshape(B, N)
    y2 = y.reshape(B, N)

    itemsize = jnp.dtype(x2.dtype).itemsize
    # Rows per block: full batch when small, otherwise one (f32) / two (<=2B) sublane sets.
    TB = min(B, 16 if itemsize <= 2 else 8)

    # Generation-aware block budget, expressed in f32-expanded bytes so the in-kernel
    # f32 temporaries of bf16 inputs are accounted for.
    vmem_cap = _vmem_capacity_bytes()
    big_vmem = vmem_cap >= 100 * 1024 * 1024               # v5e/v6e: 128 MiB, v7x: 64 MiB
    block_f32_bytes = (8 if big_vmem else 4) * 1024 * 1024
    vmem_limit = (96 if big_vmem else 48) * 1024 * 1024

    tn_cap = max(_LANE, (block_f32_bytes // (TB * 4)) // _LANE * _LANE)
    if tn_cap_override is not None:
        tn_cap = max(_LANE, int(tn_cap_override))

    if N <= tn_cap:
        TN = N                                              # full-dim block; no ragged tile
    else:
        # Balanced tiles: padding bounded to < 128 lanes in the last tile.
        num_tiles = _cdiv(N, tn_cap)
        TN = _round_up(_cdiv(N, num_tiles), _LANE)
    n_tiles = _cdiv(N, TN)
    nb = _cdiv(B, TB)

    # Split the N-tile range over a leading "parallel" axis when a single batch block
    # would otherwise leave one v7x TensorCore idle (harmless on single-TC chips).
    num_splits = 2 if (nb == 1 and n_tiles >= 2) else 1
    tiles_per_split = _cdiv(n_tiles, num_splits)
    has_phantom = num_splits * tiles_per_split > n_tiles
    mask_tail = (N % TN) != 0

    def in_index_map(s, i, k):
        t = s * tiles_per_split + k
        if has_phantom:
            t = jnp.minimum(t, n_tiles - 1)   # clamp duplicate tile (its sums are skipped)
        return (i, t)

    in_spec = pl.BlockSpec((TB, TN), in_index_map)
    out_spec = pl.BlockSpec((1, TB, 1), lambda s, i, k: (s, i, 0))

    kernel = functools.partial(
        _moments_kernel,
        tiles_per_split=tiles_per_split, n_tiles=n_tiles, tn=TN, n_true=N,
        mask_tail=mask_tail, has_phantom=has_phantom)

    moment_shape = jax.ShapeDtypeStruct((num_splits, B, 1), jnp.float32)
    moments = pl.pallas_call(
        kernel,
        out_shape=(moment_shape,) * 5,
        grid=(num_splits, nb, tiles_per_split),
        in_specs=[in_spec, in_spec],
        out_specs=(out_spec,) * 5,
        compiler_params=pltpu.CompilerParams(
            dimension_semantics=("parallel", "parallel", "arbitrary"),
            vmem_limit_bytes=vmem_limit,
        ),
    )(x2, y2)

    # Combine split partials; CCC per sample + batch mean on tiny (B,) vectors.
    sx, sy, sxx, syy, sxy = [m.sum(axis=0)[:, 0] for m in moments]
    n = jnp.float32(N)
    mean_x = sx / n
    mean_y = sy / n
    inv_nm1 = 1.0 / (n - 1.0)                               # unbiased, as torchmetrics
    var_x = (sxx - n * mean_x * mean_x) * inv_nm1
    var_y = (syy - n * mean_y * mean_y) * inv_nm1
    cov = (sxy - n * mean_x * mean_y) * inv_nm1
    ccc = 2.0 * cov / (var_x + var_y + (mean_x - mean_y) ** 2)
    return jnp.mean(ccc)


def _cc_loss_ref(x, y):
    """Pure-JAX reference mirroring the PyTorch module (two-pass, unbiased)."""
    B = x.shape[0]
    xf = x.reshape(B, -1).astype(jnp.float32)
    yf = y.reshape(B, -1).astype(jnp.float32)
    n = xf.shape[1]
    mx = jnp.mean(xf, axis=1)
    my = jnp.mean(yf, axis=1)
    dx = xf - mx[:, None]
    dy = yf - my[:, None]
    var_x = jnp.sum(dx * dx, axis=1) / (n - 1)
    var_y = jnp.sum(dy * dy, axis=1) / (n - 1)
    cov = jnp.sum(dx * dy, axis=1) / (n - 1)
    ccc = 2.0 * cov / (var_x + var_y + (mx - my) ** 2)
    return jnp.mean(ccc)


if __name__ == "__main__":
    key = jax.random.PRNGKey(0)
    kx, ky, kz, kw = jax.random.split(key, 4)

    def check(x, y, **kwargs):
        out = jax.block_until_ready(cc_loss(x, y, **kwargs))
        ref = jax.block_until_ready(_cc_loss_ref(x, y))
        np.testing.assert_allclose(np.asarray(out), np.asarray(ref), rtol=1e-4, atol=1e-5)

    # Primary: B=2, C=4, H=W=16 (N=1024), f32, y correlated with x.
    x = jax.random.normal(kx, (2, 4, 16, 16), dtype=jnp.float32)
    y = 0.7 * x + 0.3 * jax.random.normal(ky, (2, 4, 16, 16), dtype=jnp.float32)
    check(x, y)

    # N=300 (not a multiple of 128): single full-dim tile, no padding/masking needed.
    x3 = jax.random.normal(kz, (3, 3, 10, 10), dtype=jnp.float32)
    y3 = 0.5 * x3 + 0.5 * jax.random.normal(kw, (3, 3, 10, 10), dtype=jnp.float32)
    check(x3, y3)

    # Force tiny tiles: balanced multi-tile N, masked ragged last tile, split-N parallel
    # axis and the clamped duplicate-tile skip all get exercised.
    check(x3, y3, tn_cap_override=128)

    # Ragged batch blocks (B=10 > TB=8) with no padding anywhere.
    xb = jax.random.normal(ky, (10, 3, 10, 10), dtype=jnp.float32)
    yb = 0.6 * xb + 0.4 * jax.random.normal(kz, (10, 3, 10, 10), dtype=jnp.float32)
    check(xb, yb)

    # bf16 pass-through (kernel casts to f32 internally; halves HBM traffic).
    check(x.astype(jnp.bfloat16), y.astype(jnp.bfloat16))

    print("KERNEL_OK")
</pallas_src>

<mosaic_0001>
module attributes {stable_mosaic.version = 11 : i64} {
  func.func @_moments_kernel(%arg0: i32, %arg1: i32, %arg2: i32, %arg3: memref<2x1024xf32, #tpu.memory_space<vmem>>, %arg4: memref<2x1024xf32, #tpu.memory_space<vmem>>, %arg5: memref<1x2x1xf32, #tpu.memory_space<vmem>>, %arg6: memref<1x2x1xf32, #tpu.memory_space<vmem>>, %arg7: memref<1x2x1xf32, #tpu.memory_space<vmem>>, %arg8: memref<1x2x1xf32, #tpu.memory_space<vmem>>, %arg9: memref<1x2x1xf32, #tpu.memory_space<vmem>>) attributes {dimension_semantics = [#tpu.dimension_semantics<parallel>, #tpu.dimension_semantics<parallel>, #tpu.dimension_semantics<arbitrary>], iteration_bounds = array<i64: 1, 1, 1>, scalar_prefetch = 0 : i64, scratch_operands = 0 : i64, tpu.core_type = #tpu.core_type<tc>, window_params = [{transform_indices = @transform_0, window_bounds = array<i64: 2, 1024>}, {transform_indices = @transform_1, window_bounds = array<i64: 2, 1024>}, {transform_indices = @transform_2, window_bounds = array<i64: 1, 2, 1>}, {transform_indices = @transform_3, window_bounds = array<i64: 1, 2, 1>}, {transform_indices = @transform_4, window_bounds = array<i64: 1, 2, 1>}, {transform_indices = @transform_5, window_bounds = array<i64: 1, 2, 1>}, {transform_indices = @transform_6, window_bounds = array<i64: 1, 2, 1>}]} {
    %c0_i32 = arith.constant 0 : i32
    %0 = arith.cmpi eq, %arg2, %c0_i32 : i32
    %1 = arith.extui %0 : i1 to i32
    %c0_i32_0 = arith.constant 0 : i32
    %2 = arith.cmpi ne, %1, %c0_i32_0 : i32
    scf.if %2 {
      %cst_38 = arith.constant 0.000000e+00 : f32
      %38 = vector.broadcast %cst_38 : f32 to vector<1x2x1xf32>
      %c0_39 = arith.constant 0 : index
      %c0_40 = arith.constant 0 : index
      %c0_41 = arith.constant 0 : index
      %39 = vector.load %arg5[%c0_39, %c0_40, %c0_41] : memref<1x2x1xf32, #tpu.memory_space<vmem>>, vector<1x2x1xf32>
      tpu.vector_store %arg5[%c0_39, %c0_40, %c0_41], %38 {strides = array<i32>} : memref<1x2x1xf32, #tpu.memory_space<vmem>>, vector<1x2x1xf32>,
      %cst_42 = arith.constant 0.000000e+00 : f32
      %40 = vector.broadcast %cst_42 : f32 to vector<1x2x1xf32>
      %c0_43 = arith.constant 0 : index
      %c0_44 = arith.constant 0 : index
      %c0_45 = arith.constant 0 : index
      %41 = vector.load %arg6[%c0_43, %c0_44, %c0_45] : memref<1x2x1xf32, #tpu.memory_space<vmem>>, vector<1x2x1xf32>
      tpu.vector_store %arg6[%c0_43, %c0_44, %c0_45], %40 {strides = array<i32>} : memref<1x2x1xf32, #tpu.memory_space<vmem>>, vector<1x2x1xf32>,
      %cst_46 = arith.constant 0.000000e+00 : f32
      %42 = vector.broadcast %cst_46 : f32 to vector<1x2x1xf32>
      %c0_47 = arith.constant 0 : index
      %c0_48 = arith.constant 0 : index
      %c0_49 = arith.constant 0 : index
      %43 = vector.load %arg7[%c0_47, %c0_48, %c0_49] : memref<1x2x1xf32, #tpu.memory_space<vmem>>, vector<1x2x1xf32>
      tpu.vector_store %arg7[%c0_47, %c0_48, %c0_49], %42 {strides = array<i32>} : memref<1x2x1xf32, #tpu.memory_space<vmem>>, vector<1x2x1xf32>,
      %cst_50 = arith.constant 0.000000e+00 : f32
      %44 = vector.broadcast %cst_50 : f32 to vector<1x2x1xf32>
      %c0_51 = arith.constant 0 : index
      %c0_52 = arith.constant 0 : index
      %c0_53 = arith.constant 0 : index
      %45 = vector.load %arg8[%c0_51, %c0_52, %c0_53] : memref<1x2x1xf32, #tpu.memory_space<vmem>>, vector<1x2x1xf32>
      tpu.vector_store %arg8[%c0_51, %c0_52, %c0_53], %44 {strides = array<i32>} : memref<1x2x1xf32, #tpu.memory_space<vmem>>, vector<1x2x1xf32>,
      %cst_54 = arith.constant 0.000000e+00 : f32
      %46 = vector.broadcast %cst_54 : f32 to vector<1x2x1xf32>
      %c0_55 = arith.constant 0 : index
      %c0_56 = arith.constant 0 : index
      %c0_57 = arith.constant 0 : index
      %47 = vector.load %arg9[%c0_55, %c0_56, %c0_57] : memref<1x2x1xf32, #tpu.memory_space<vmem>>, vector<1x2x1xf32>
      tpu.vector_store %arg9[%c0_55, %c0_56, %c0_57], %46 {strides = array<i32>} : memref<1x2x1xf32, #tpu.memory_space<vmem>>, vector<1x2x1xf32>,
    } else {
    }
    %c0 = arith.constant 0 : index
    %c0_1 = arith.constant 0 : index
    %3 = vector.load %arg3[%c0, %c0_1] : memref<2x1024xf32, #tpu.memory_space<vmem>>, vector<2x1024xf32>
    %c0_2 = arith.constant 0 : index
    %c0_3 = arith.constant 0 : index
    %4 = vector.load %arg4[%c0_2, %c0_3] : memref<2x1024xf32, #tpu.memory_space<vmem>>, vector<2x1024xf32>
    %c0_4 = arith.constant 0 : index
    %c0_5 = arith.constant 0 : index
    %c0_6 = arith.constant 0 : index
    %5 = vector.load %arg5[%c0_4, %c0_5, %c0_6] : memref<1x2x1xf32, #tpu.memory_space<vmem>>, vector<1x2x1xf32>
    %cst = arith.constant dense<0.000000e+00> : vector<2xf32>
    %6 = vector.multi_reduction <add>, %3, %cst [1] : vector<2x1024xf32> to vector<2xf32>
    %7 = vector.shape_cast %6 : vector<2xf32> to vector<2x1xf32>
    %8 = vector.shape_cast %7 : vector<2x1xf32> to vector<1x2x1xf32>
    %9 = arith.addf %5, %8 : vector<1x2x1xf32>
    %c0_7 = arith.constant 0 : index
    %c0_8 = arith.constant 0 : index
    %c0_9 = arith.constant 0 : index
    %10 = vector.load %arg5[%c0_7, %c0_8, %c0_9] : memref<1x2x1xf32, #tpu.memory_space<vmem>>, vector<1x2x1xf32>
    tpu.vector_store %arg5[%c0_7, %c0_8, %c0_9], %9 {strides = array<i32>} : memref<1x2x1xf32, #tpu.memory_space<vmem>>, vector<1x2x1xf32>,
    %c0_10 = arith.constant 0 : index
    %c0_11 = arith.constant 0 : index
    %c0_12 = arith.constant 0 : index
    %11 = vector.load %arg6[%c0_10, %c0_11, %c0_12] : memref<1x2x1xf32, #tpu.memory_space<vmem>>, vector<1x2x1xf32>
    %cst_13 = arith.constant dense<0.000000e+00> : vector<2xf32>
    %12 = vector.multi_reduction <add>, %4, %cst_13 [1] : vector<2x1024xf32> to vector<2xf32>
    %13 = vector.shape_cast %12 : vector<2xf32> to vector<2x1xf32>
    %14 = vector.shape_cast %13 : vector<2x1xf32> to vector<1x2x1xf32>
    %15 = arith.addf %11, %14 : vector<1x2x1xf32>
    %c0_14 = arith.constant 0 : index
    %c0_15 = arith.constant 0 : index
    %c0_16 = arith.constant 0 : index
    %16 = vector.load %arg6[%c0_14, %c0_15, %c0_16] : memref<1x2x1xf32, #tpu.memory_space<vmem>>, vector<1x2x1xf32>
    tpu.vector_store %arg6[%c0_14, %c0_15, %c0_16], %15 {strides = array<i32>} : memref<1x2x1xf32, #tpu.memory_space<vmem>>, vector<1x2x1xf32>,
    %c0_17 = arith.constant 0 : index
    %c0_18 = arith.constant 0 : index
    %c0_19 = arith.constant 0 : index
    %17 = vector.load %arg7[%c0_17, %c0_18, %c0_19] : memref<1x2x1xf32, #tpu.memory_space<vmem>>, vector<1x2x1xf32>
    %18 = arith.mulf %3, %3 : vector<2x1024xf32>
    %cst_20 = arith.constant dense<0.000000e+00> : vector<2xf32>
    %19 = vector.multi_reduction <add>, %18, %cst_20 [1] : vector<2x1024xf32> to vector<2xf32>
    %20 = vector.shape_cast %19 : vector<2xf32> to vector<2x1xf32>
    %21 = vector.shape_cast %20 : vector<2x1xf32> to vector<1x2x1xf32>
    %22 = arith.addf %17, %21 : vector<1x2x1xf32>
    %c0_21 = arith.constant 0 : index
    %c0_22 = arith.constant 0 : index
    %c0_23 = arith.constant 0 : index
    %23 = vector.load %arg7[%c0_21, %c0_22, %c0_23] : memref<1x2x1xf32, #tpu.memory_space<vmem>>, vector<1x2x1xf32>
    tpu.vector_store %arg7[%c0_21, %c0_22, %c0_23], %22 {strides = array<i32>} : memref<1x2x1xf32, #tpu.memory_space<vmem>>, vector<1x2x1xf32>,
    %c0_24 = arith.constant 0 : index
    %c0_25 = arith.constant 0 : index
    %c0_26 = arith.constant 0 : index
    %24 = vector.load %arg8[%c0_24, %c0_25, %c0_26] : memref<1x2x1xf32, #tpu.memory_space<vmem>>, vector<1x2x1xf32>
    %25 = arith.mulf %4, %4 : vector<2x1024xf32>
    %cst_27 = arith.constant dense<0.000000e+00> : vector<2xf32>
    %26 = vector.multi_reduction <add>, %25, %cst_27 [1] : vector<2x1024xf32> to vector<2xf32>
    %27 = vector.shape_cast %26 : vector<2xf32> to vector<2x1xf32>
    %28 = vector.shape_cast %27 : vector<2x1xf32> to vector<1x2x1xf32>
    %29 = arith.addf %24, %28 : vector<1x2x1xf32>
    %c0_28 = arith.constant 0 : index
    %c0_29 = arith.constant 0 : index
    %c0_30 = arith.constant 0 : index
    %30 = vector.load %arg8[%c0_28, %c0_29, %c0_30] : memref<1x2x1xf32, #tpu.memory_space<vmem>>, vector<1x2x1xf32>
    tpu.vector_store %arg8[%c0_28, %c0_29, %c0_30], %29 {strides = array<i32>} : memref<1x2x1xf32, #tpu.memory_space<vmem>>, vector<1x2x1xf32>,
    %c0_31 = arith.constant 0 : index
    %c0_32 = arith.constant 0 : index
    %c0_33 = arith.constant 0 : index
    %31 = vector.load %arg9[%c0_31, %c0_32, %c0_33] : memref<1x2x1xf32, #tpu.memory_space<vmem>>, vector<1x2x1xf32>
    %32 = arith.mulf %3, %4 : vector<2x1024xf32>
    %cst_34 = arith.constant dense<0.000000e+00> : vector<2xf32>
    %33 = vector.multi_reduction <add>, %32, %cst_34 [1] : vector<2x1024xf32> to vector<2xf32>
    %34 = vector.shape_cast %33 : vector<2xf32> to vector<2x1xf32>
    %35 = vector.shape_cast %34 : vector<2x1xf32> to vector<1x2x1xf32>
    %36 = arith.addf %31, %35 : vector<1x2x1xf32>
    %c0_35 = arith.constant 0 : index
    %c0_36 = arith.constant 0 : index
    %c0_37 = arith.constant 0 : index
    %37 = vector.load %arg9[%c0_35, %c0_36, %c0_37] : memref<1x2x1xf32, #tpu.memory_space<vmem>>, vector<1x2x1xf32>
    tpu.vector_store %arg9[%c0_35, %c0_36, %c0_37], %36 {strides = array<i32>} : memref<1x2x1xf32, #tpu.memory_space<vmem>>, vector<1x2x1xf32>,
    return
  }
  func.func @transform_0(%arg0: i32, %arg1: i32, %arg2: i32) -> (i32, i32) {
    %c1_i32 = arith.constant 1 : i32
    %0 = arith.muli %arg0, %c1_i32 : i32
    %1 = arith.addi %0, %arg2 : i32
    %c0_i32 = arith.constant 0 : i32
    return %arg1, %1 : i32, i32
  }
  func.func @transform_1(%arg0: i32, %arg1: i32, %arg2: i32) -> (i32, i32) {
    %c1_i32 = arith.constant 1 : i32
    %0 = arith.muli %arg0, %c1_i32 : i32
    %1 = arith.addi %0, %arg2 : i32
    %c0_i32 = arith.constant 0 : i32
    return %arg1, %1 : i32, i32
  }
  func.func @transform_2(%arg0: i32, %arg1: i32, %arg2: i32) -> (i32, i32, i32) {
    %c0_i32 = arith.constant 0 : i32
    %c0_i32_0 = arith.constant 0 : i32
    return %arg0, %arg1, %c0_i32 : i32, i32, i32
  }
  func.func @transform_3(%arg0: i32, %arg1: i32, %arg2: i32) -> (i32, i32, i32) {
    %c0_i32 = arith.constant 0 : i32
    %c0_i32_0 = arith.constant 0 : i32
    return %arg0, %arg1, %c0_i32 : i32, i32, i32
  }
  func.func @transform_4(%arg0: i32, %arg1: i32, %arg2: i32) -> (i32, i32, i32) {
    %c0_i32 = arith.constant 0 : i32
    %c0_i32_0 = arith.constant 0 : i32
    return %arg0, %arg1, %c0_i32 : i32, i32, i32
  }
  func.func @transform_5(%arg0: i32, %arg1: i32, %arg2: i32) -> (i32, i32, i32) {
    %c0_i32 = arith.constant 0 : i32
    %c0_i32_0 = arith.constant 0 : i32
    return %arg0, %arg1, %c0_i32 : i32, i32, i32
  }
  func.func @transform_6(%arg0: i32, %arg1: i32, %arg2: i32) -> (i32, i32, i32) {
    %c0_i32 = arith.constant 0 : i32
    %c0_i32_0 = arith.constant 0 : i32
    return %arg0, %arg1, %c0_i32 : i32, i32, i32
  }
}

</mosaic_0001>

<llo_original>
// kernel: cc_loss.1
$region0: #{cc_loss.1}
  #allocation0 [shape = 'u32[]', space=smem, size = 0x4, offset = 0x4, fixed_abs, tag = 'smem constant byte address 0x4 - core index']
  #allocation1 [shape = 'u32[144,128]{1,0:T(1,128)}', space=vmem, size = 0x12000, scoped, tag = 'internal scratch']
  %s0 = inlined_call_operand.vmem [shape: f32[2,1024], index: 0, kind: input, shape index: {}]
  %s1 = inlined_call_operand.vmem [shape: f32[2,1024], index: 1, kind: input, shape index: {}]
  %s2 = inlined_call_operand.vmem [shape: f32[1,2,1], index: 2, kind: output, shape index: {0}]
  %s3 = inlined_call_operand.vmem [shape: f32[1,2,1], index: 3, kind: output, shape index: {1}]
  %s4 = inlined_call_operand.vmem [shape: f32[1,2,1], index: 4, kind: output, shape index: {2}]
  %s5 = inlined_call_operand.vmem [shape: f32[1,2,1], index: 5, kind: output, shape index: {3}]
  %s6 = inlined_call_operand.vmem [shape: f32[1,2,1], index: 6, kind: output, shape index: {4}]
  %7 = xla_tuple %s2, %s3, %s4, %s5, %s6
  %s8 = sld [smem:[#allocation0]]
  $region54: #{cc_loss.1} parent=0
    _
  %s10 = ssub.s32 1, %s8
  %s11 = scalar_select 0, %s10, %s8
  // Predicated region
  $region2: #{cc_loss.1} parent=0 // pred_check
    _
  $region3: #{cc_loss.1} parent=0 // pred_check_branch
    %13 = sbr.rel (0) target = $region5
  $region4: #{cc_loss.1} parent=0 // pred_region
    %s14 = sadd.s32 0, 0
    %s15 = smul.u32 8, %s14
    %p16 = scmp.lt.s32.totalorder %s15, 7
    %s17 = scalar_select %p16, %s15, 7
    %s18 = smul.addr %s17, 2
    %s19 = scalar_lea.vmem %s0, %s18
    %s20 = sadd.s32 0, 0
    %s21 = smul.u32 8, %s20
  $region5: #{cc_loss.1} parent=0 // pred_fallthru
    _
  // Predicated region
  $region6: #{cc_loss.1} parent=0 // pred_check
    _
  $region7: #{cc_loss.1} parent=0 // pred_check_branch
    %23 = sbr.rel (0) target = $region9
  $region8: #{cc_loss.1} parent=0 // pred_region
    %s24 = sadd.s32 0, 0
    %s25 = smul.u32 8, %s24
    %p26 = scmp.lt.s32.totalorder %s25, 7
    %s27 = scalar_select %p26, %s25, 7
    %s28 = smul.addr %s27, 2
    %s29 = scalar_lea.vmem %s1, %s28
    %s30 = sadd.s32 0, 0
    %s31 = smul.u32 8, %s30
  $region9: #{cc_loss.1} parent=0 // pred_fallthru
    _
  %s32 = sadd.s32 0, 0
  %s33 = smul.u32 8, %s32
  %p34 = scmp.lt.s32.totalorder %s33, 7
  %s35 = scalar_select %p34, %s33, 7
  %s36 = smul.addr %s35, 2
  %s37 = scalar_lea.vmem %s0, %s36
  %s38 = sadd.s32 0, 0
  %s39 = smul.u32 8, %s38
  %p40 = scmp.lt.s32.totalorder %s39, 7
  %s41 = scalar_select %p40, %s39, 7
  %s42 = smul.addr %s41, 2
  %s43 = scalar_lea.vmem %s1, %s42
  %s44 = sadd.s32 0, 0
  %s45 = smul.u32 8, %s44
  %p46 = scmp.lt.s32.totalorder %s45, 7
  %s47 = scalar_select %p46, %s45, 7
  %s48 = smul.addr %s47, 2
  %s49 = scalar_lea.vmem %s0, %s48
  %s50 = sadd.s32 0, 0
  %s51 = smul.u32 8, %s50
  %s52 = sadd.s32 0, 0
  %s53 = smul.u32 8, %s52
  %p54 = scmp.lt.s32.totalorder %s53, 7
  %s55 = scalar_select %p54, %s53, 7
  %s56 = smul.addr %s55, 2
  %s57 = scalar_lea.vmem %s1, %s56
  %s58 = sadd.s32 0, 0
  %s59 = smul.u32 8, %s58
  %p60 = scmp.eq.s32.totalorder 0, 0
  // Predicated region
  $region10: #{cc_loss.1} parent=0 // pred_check
    %p61 = pneg %p60
  $region11: #{cc_loss.1} parent=0 // pred_check_branch
    %63 = sbr.rel (%p61) target = $region13
  $region12: #{cc_loss.1} parent=0 // pred_region
    %vm64 = vcmask 1024
    %65 = vst.msk [vmem:[%s2] sm:$0x3] %vm64, 0.0
    %66 = vst.msk [vmem:[%s3] sm:$0x3] %vm64, 0.0
    %67 = vst.msk [vmem:[%s4] sm:$0x3] %vm64, 0.0
    %68 = vst.msk [vmem:[%s5] sm:$0x3] %vm64, 0.0
    %69 = vst.msk [vmem:[%s6] sm:$0x3] %vm64, 0.0
  $region13: #{cc_loss.1} parent=0 // pred_fallthru
    _
  %v70 = vld [vmem:[%s49] sm:$0xff]
  %v71 = vld [vmem:[%s49 + $0x8] sm:$0xff]
  %v72 = vld [vmem:[%s57] sm:$0xff]
  %v73 = vld [vmem:[%s57 + $0x8] sm:$0xff]
  %v74 = vld [vmem:[%s2] sm:$0x3]
  %v77 = vcombine.high %v70, %v70
  %v79 = vunpack.c.l.s4 1983009808
  %v80 = vunpack.c.0.s8 %v79
  %v81 = vlaneseq
  %v82 = vshrl.u32 %v81, 7
  %v83 = vsub.s32 %v80, %v82
  %v84 = vrot.slane %v70, %v83
  %v86 = vunpack.c.l.s4 1983009808
  %v87 = vunpack.c.0.s8 %v86
  %v88 = vlaneseq
  %v89 = vshrl.u32 %v88, 7
  %v90 = vsub.s32 %v87, %v89
  %v91 = vrot.slane %v77, %v90
  %v92 = vcombine.high %v84, %v84
  %v93 = vcombine.high %v91, %v91
  %v94 = vcombine.high %v71, %v71
  %v96 = vunpack.c.l.s4 1983009808
  %v97 = vunpack.c.0.s8 %v96
  %v98 = vlaneseq
  %v99 = vshrl.u32 %v98, 7
  %v100 = vsub.s32 %v97, %v99
  %v101 = vrot.slane %v71, %v100
  %v103 = vunpack.c.l.s4 1983009808
  %v104 = vunpack.c.0.s8 %v103
  %v105 = vlaneseq
  %v106 = vshrl.u32 %v105, 7
  %v107 = vsub.s32 %v104, %v106
  %v108 = vrot.slane %v94, %v107
  %v109 = vcombine.high %v101, %v101
  %v110 = vcombine.high %v108, %v108
  %vm119 = vcmask 1041408
  %v120 = vsel %vm119, %v84, 0.0
  %v121 = vsel %vm119, %v92, 0.0
  %v122 = vadd.f32 %v120, %v121
  %v123 = vsel %vm119, %v91, 0.0
  %v124 = vadd.f32 %v122, %v123
  %v125 = vsel %vm119, %v93, 0.0
  %v126 = vadd.f32 %v124, %v125
  %v127 = vsel %vm119, %v101, 0.0
  %v128 = vadd.f32 %v126, %v127
  %v129 = vsel %vm119, %v109, 0.0
  %v130 = vadd.f32 %v128, %v129
  %v131 = vsel %vm119, %v108, 0.0
  %v132 = vadd.f32 %v130, %v131
  %v133 = vsel %vm119, %v110, 0.0
  %v134 = vadd.f32 %v132, %v133
  %135 = vadd.xlane.f32.xlu0 %v134
  %v136 = vpop.xlane.xlu0 %135
  %v137 = vadd.f32 %v74, %v136
  %vm138 = vcmask 1024
  %139 = vst.msk [vmem:[%s2] sm:$0x3] %vm138, %v137
  %v140 = vld [vmem:[%s3] sm:$0x3]
  %v143 = vcombine.high %v72, %v72
  %v145 = vunpack.c.l.s4 1983009808
  %v146 = vunpack.c.0.s8 %v145
  %v147 = vlaneseq
  %v148 = vshrl.u32 %v147, 7
  %v149 = vsub.s32 %v146, %v148
  %v150 = vrot.slane %v72, %v149
  %v152 = vunpack.c.l.s4 1983009808
  %v153 = vunpack.c.0.s8 %v152
  %v154 = vlaneseq
  %v155 = vshrl.u32 %v154, 7
  %v156 = vsub.s32 %v153, %v155
  %v157 = vrot.slane %v143, %v156
  %v158 = vcombine.high %v150, %v150
  %v159 = vcombine.high %v157, %v157
  %v160 = vcombine.high %v73, %v73
  %v162 = vunpack.c.l.s4 1983009808
  %v163 = vunpack.c.0.s8 %v162
  %v164 = vlaneseq
  %v165 = vshrl.u32 %v164, 7
  %v166 = vsub.s32 %v163, %v165
  %v167 = vrot.slane %v73, %v166
  %v169 = vunpack.c.l.s4 1983009808
  %v170 = vunpack.c.0.s8 %v169
  %v171 = vlaneseq
  %v172 = vshrl.u32 %v171, 7
  %v173 = vsub.s32 %v170, %v172
  %v174 = vrot.slane %v160, %v173
  %v175 = vcombine.high %v167, %v167
  %v176 = vcombine.high %v174, %v174
  %v185 = vsel %vm119, %v150, 0.0
  %v186 = vsel %vm119, %v158, 0.0
  %v187 = vadd.f32 %v185, %v186
  %v188 = vsel %vm119, %v157, 0.0
  %v189 = vadd.f32 %v187, %v188
  %v190 = vsel %vm119, %v159, 0.0
  %v191 = vadd.f32 %v189, %v190
  %v192 = vsel %vm119, %v167, 0.0
  %v193 = vadd.f32 %v191, %v192
  %v194 = vsel %vm119, %v175, 0.0
  %v195 = vadd.f32 %v193, %v194
  %v196 = vsel %vm119, %v174, 0.0
  %v197 = vadd.f32 %v195, %v196
  %v198 = vsel %vm119, %v176, 0.0
  %v199 = vadd.f32 %v197, %v198
  %200 = vadd.xlane.f32.xlu0 %v199
  %v201 = vpop.xlane.xlu0 %200
  %v202 = vadd.f32 %v140, %v201
  %203 = vst.msk [vmem:[%s3] sm:$0x3] %vm138, %v202
  %v204 = vld [vmem:[%s4] sm:$0x3]
  %v205 = vmul.f32 %v70, %v70
  %v206 = vmul.f32 %v71, %v71
  %v209 = vcombine.high %v205, %v205
  %v211 = vunpack.c.l.s4 1983009808
  %v212 = vunpack.c.0.s8 %v211
  %v213 = vlaneseq
  %v214 = vshrl.u32 %v213, 7
  %v215 = vsub.s32 %v212, %v214
  %v216 = vrot.slane %v205, %v215
  %v218 = vunpack.c.l.s4 1983009808
  %v219 = vunpack.c.0.s8 %v218
  %v220 = vlaneseq
  %v221 = vshrl.u32 %v220, 7
  %v222 = vsub.s32 %v219, %v221
  %v223 = vrot.slane %v209, %v222
  %v224 = vcombine.high %v216, %v216
  %v225 = vcombine.high %v223, %v223
  %v226 = vcombine.high %v206, %v206
  %v228 = vunpack.c.l.s4 1983009808
  %v229 = vunpack.c.0.s8 %v228
  %v230 = vlaneseq
  %v231 = vshrl.u32 %v230, 7
  %v232 = vsub.s32 %v229, %v231
  %v233 = vrot.slane %v206, %v232
  %v235 = vunpack.c.l.s4 1983009808
  %v236 = vunpack.c.0.s8 %v235
  %v237 = vlaneseq
  %v238 = vshrl.u32 %v237, 7
  %v239 = vsub.s32 %v236, %v238
  %v240 = vrot.slane %v226, %v239
  %v241 = vcombine.high %v233, %v233
  %v242 = vcombine.high %v240, %v240
  %v251 = vsel %vm119, %v216, 0.0
  %v252 = vsel %vm119, %v224, 0.0
  %v253 = vadd.f32 %v251, %v252
  %v254 = vsel %vm119, %v223, 0.0
  %v255 = vadd.f32 %v253, %v254
  %v256 = vsel %vm119, %v225, 0.0
  %v257 = vadd.f32 %v255, %v256
  %v258 = vsel %vm119, %v233, 0.0
  %v259 = vadd.f32 %v257, %v258
  %v260 = vsel %vm119, %v241, 0.0
  %v261 = vadd.f32 %v259, %v260
  %v262 = vsel %vm119, %v240, 0.0
  %v263 = vadd.f32 %v261, %v262
  %v264 = vsel %vm119, %v242, 0.0
  %v265 = vadd.f32 %v263, %v264
  %266 = vadd.xlane.f32.xlu0 %v265
  %v267 = vpop.xlane.xlu0 %266
  %v268 = vadd.f32 %v204, %v267
  %269 = vst.msk [vmem:[%s4] sm:$0x3] %vm138, %v268
  %v270 = vld [vmem:[%s5] sm:$0x3]
  %v271 = vmul.f32 %v72, %v72
  %v272 = vmul.f32 %v73, %v73
  %v275 = vcombine.high %v271, %v271
  %v277 = vunpack.c.l.s4 1983009808
  %v278 = vunpack.c.0.s8 %v277
  %v279 = vlaneseq
  %v280 = vshrl.u32 %v279, 7
  %v281 = vsub.s32 %v278, %v280
  %v282 = vrot.slane %v271, %v281
  %v284 = vunpack.c.l.s4 1983009808
  %v285 = vunpack.c.0.s8 %v284
  %v286 = vlaneseq
  %v287 = vshrl.u32 %v286, 7
  %v288 = vsub.s32 %v285, %v287
  %v289 = vrot.slane %v275, %v288
  %v290 = vcombine.high %v282, %v282
  %v291 = vcombine.high %v289, %v289
  %v292 = vcombine.high %v272, %v272
  %v294 = vunpack.c.l.s4 1983009808
  %v295 = vunpack.c.0.s8 %v294
  %v296 = vlaneseq
  %v297 = vshrl.u32 %v296, 7
  %v298 = vsub.s32 %v295, %v297
  %v299 = vrot.slane %v272, %v298
  %v301 = vunpack.c.l.s4 1983009808
  %v302 = vunpack.c.0.s8 %v301
  %v303 = vlaneseq
  %v304 = vshrl.u32 %v303, 7
  %v305 = vsub.s32 %v302, %v304
  %v306 = vrot.slane %v292, %v305
  %v307 = vcombine.high %v299, %v299
  %v308 = vcombine.high %v306, %v306
  %v317 = vsel %vm119, %v282, 0.0
  %v318 = vsel %vm119, %v290, 0.0
  %v319 = vadd.f32 %v317, %v318
  %v320 = vsel %vm119, %v289, 0.0
  %v321 = vadd.f32 %v319, %v320
  %v322 = vsel %vm119, %v291, 0.0
  %v323 = vadd.f32 %v321, %v322
  %v324 = vsel %vm119, %v299, 0.0
  %v325 = vadd.f32 %v323, %v324
  %v326 = vsel %vm119, %v307, 0.0
  %v327 = vadd.f32 %v325, %v326
  %v328 = vsel %vm119, %v306, 0.0
  %v329 = vadd.f32 %v327, %v328
  %v330 = vsel %vm119, %v308, 0.0
  %v331 = vadd.f32 %v329, %v330
  %332 = vadd.xlane.f32.xlu0 %v331
  %v333 = vpop.xlane.xlu0 %332
  %v334 = vadd.f32 %v270, %v333
  %335 = vst.msk [vmem:[%s5] sm:$0x3] %vm138, %v334
  %v336 = vld [vmem:[%s6] sm:$0x3]
  %v337 = vmul.f32 %v70, %v72
  %v338 = vmul.f32 %v71, %v73
  %v341 = vcombine.high %v337, %v337
  %v343 = vunpack.c.l.s4 1983009808
  %v344 = vunpack.c.0.s8 %v343
  %v345 = vlaneseq
  %v346 = vshrl.u32 %v345, 7
  %v347 = vsub.s32 %v344, %v346
  %v348 = vrot.slane %v337, %v347
  %v350 = vunpack.c.l.s4 1983009808
  %v351 = vunpack.c.0.s8 %v350
  %v352 = vlaneseq
  %v353 = vshrl.u32 %v352, 7
  %v354 = vsub.s32 %v351, %v353
  %v355 = vrot.slane %v341, %v354
  %v356 = vcombine.high %v348, %v348
  %v357 = vcombine.high %v355, %v355
  %v358 = vcombine.high %v338, %v338
  %v360 = vunpack.c.l.s4 1983009808
  %v361 = vunpack.c.0.s8 %v360
  %v362 = vlaneseq
  %v363 = vshrl.u32 %v362, 7
  %v364 = vsub.s32 %v361, %v363
  %v365 = vrot.slane %v338, %v364
  %v367 = vunpack.c.l.s4 1983009808
  %v368 = vunpack.c.0.s8 %v367
  %v369 = vlaneseq
  %v370 = vshrl.u32 %v369, 7
  %v371 = vsub.s32 %v368, %v370
  %v372 = vrot.slane %v358, %v371
  %v373 = vcombine.high %v365, %v365
  %v374 = vcombine.high %v372, %v372
  %v383 = vsel %vm119, %v348, 0.0
  %v384 = vsel %vm119, %v356, 0.0
  %v385 = vadd.f32 %v383, %v384
  %v386 = vsel %vm119, %v355, 0.0
  %v387 = vadd.f32 %v385, %v386
  %v388 = vsel %vm119, %v357, 0.0
  %v389 = vadd.f32 %v387, %v388
  %v390 = vsel %vm119, %v365, 0.0
  %v391 = vadd.f32 %v389, %v390
  %v392 = vsel %vm119, %v373, 0.0
  %v393 = vadd.f32 %v391, %v392
  %v394 = vsel %vm119, %v372, 0.0
  %v395 = vadd.f32 %v393, %v394
  %v396 = vsel %vm119, %v374, 0.0
  %v397 = vadd.f32 %v395, %v396
  %398 = vadd.xlane.f32.xlu0 %v397
  %v399 = vpop.xlane.xlu0 %398
  %v400 = vadd.f32 %v336, %v399
  %401 = vst.msk [vmem:[%s6] sm:$0x3] %vm138, %v400
  // Predicated region
  $region14: #{cc_loss.1} parent=0 // pred_check
    _
  $region15: #{cc_loss.1} parent=0 // pred_check_branch
    %403 = sbr.rel (0) target = $region17
  $region16: #{cc_loss.1} parent=0 // pred_region
    _
  $region17: #{cc_loss.1} parent=0 // pred_fallthru
    _
  // Predicated region
  $region18: #{cc_loss.1} parent=0 // pred_check
    _
  $region19: #{cc_loss.1} parent=0 // pred_check_branch
    %405 = sbr.rel (0) target = $region21
  $region20: #{cc_loss.1} parent=0 // pred_region
    _
  $region21: #{cc_loss.1} parent=0 // pred_fallthru
    _
  // Predicated region
  $region22: #{cc_loss.1} parent=0 // pred_check
    _
  $region23: #{cc_loss.1} parent=0 // pred_check_branch
    %407 = sbr.rel (0) target = $region25
  $region24: #{cc_loss.1} parent=0 // pred_region
    _
  $region25: #{cc_loss.1} parent=0 // pred_fallthru
    _
  // Predicated region
  $region26: #{cc_loss.1} parent=0 // pred_check
    _
  $region27: #{cc_loss.1} parent=0 // pred_check_branch
    %409 = sbr.rel (0) target = $region29
  $region28: #{cc_loss.1} parent=0 // pred_region
    _
  $region29: #{cc_loss.1} parent=0 // pred_fallthru
    _
  // Predicated region
  $region30: #{cc_loss.1} parent=0 // pred_check
    _
  $region31: #{cc_loss.1} parent=0 // pred_check_branch
    %411 = sbr.rel (0) target = $region33
  $region32: #{cc_loss.1} parent=0 // pred_region
    _
  $region33: #{cc_loss.1} parent=0 // pred_fallthru
    _
  // Predicated region
  $region34: #{cc_loss.1} parent=0 // pred_check
    _
  $region35: #{cc_loss.1} parent=0 // pred_check_branch
    %413 = sbr.rel (0) target = $region37
  $region36: #{cc_loss.1} parent=0 // pred_region
    _
  $region37: #{cc_loss.1} parent=0 // pred_fallthru
    _
  // Predicated region
  $region38: #{cc_loss.1} parent=0 // pred_check
    _
  $region39: #{cc_loss.1} parent=0 // pred_check_branch
    %415 = sbr.rel (0) target = $region41
  $region40: #{cc_loss.1} parent=0 // pred_region
    _
  $region41: #{cc_loss.1} parent=0 // pred_fallthru
    _
  // Predicated region
  $region42: #{cc_loss.1} parent=0 // pred_check
    _
  $region43: #{cc_loss.1} parent=0 // pred_check_branch
    %417 = sbr.rel (0) target = $region45
  $region44: #{cc_loss.1} parent=0 // pred_region
    _
  $region45: #{cc_loss.1} parent=0 // pred_fallthru
    _
  // Predicated region
  $region46: #{cc_loss.1} parent=0 // pred_check
    _
  $region47: #{cc_loss.1} parent=0 // pred_check_branch
    %419 = sbr.rel (0) target = $region49
  $region48: #{cc_loss.1} parent=0 // pred_region
    _
  $region49: #{cc_loss.1} parent=0 // pred_fallthru
    _
  // Predicated region
  $region50: #{cc_loss.1} parent=0 // pred_check
    _
  $region51: #{cc_loss.1} parent=0 // pred_check_branch
    %421 = sbr.rel (0) target = $region53
  $region52: #{cc_loss.1} parent=0 // pred_region
    _
  $region53: #{cc_loss.1} parent=0 // pred_fallthru
    _

</llo_original>
